<compile_context>
chip_gen: v5e
topology: v5e:2x2
jax: 0.10.0
libtpu: 0.0.40
codegen_flags: <defaults>
</compile_context>

<pallas_src>
import jax
import jax.numpy as jnp
from jax.experimental import pallas as pl
from jax.experimental.pallas import tpu as pltpu


def _round_up(x, m):
    return ((x + m - 1) // m) * m


def _time_embed_kernel(x_ref, w1_ref, b1_ref, w2_ref, b2_ref, o_ref):
    # First linear (MXU, f32 accumulation) + f32 bias + ReLU on the VPU.
    h = jnp.dot(x_ref[...], w1_ref[...], preferred_element_type=jnp.float32)
    h = jnp.maximum(h + b1_ref[...], 0.0)
    # Second linear; cast activations back to the weight dtype for the MXU.
    y = jnp.dot(h.astype(w2_ref.dtype), w2_ref[...],
                preferred_element_type=jnp.float32)
    o_ref[...] = (y + b2_ref[...]).astype(o_ref.dtype)


def prepare_time_embedder_params(w1, b1, w2, b2, *, dtype=jnp.float32):
    """One-time parameter formatting (hoisted out of the per-call hot path).

    w1: (hid, temb), b1: (temb,), w2: (temb, temb), b2: (temb,).
    dtype: storage/MXU-input dtype for the weights (use jnp.bfloat16 on
           v6e/v7x for the batched path); biases stay f32 (bias add + ReLU are
           always done in f32).
    """
    hid, temb = w1.shape
    assert w2.shape == (temb, temb)
    assert b1.shape == (temb,) and b2.shape == (temb,)
    return (w1.astype(dtype),
            b1.reshape(1, temb).astype(jnp.float32),
            w2.astype(dtype),
            b2.reshape(1, temb).astype(jnp.float32))


_SMALL_B = 64  # below this: single un-gridded invocation (no pipeline prologue)


def time_linear_embedder(t_emb, params, *, block_b=1024, out_dtype=None):
    """y = relu(t_emb @ w1 + b1) @ w2 + b2, fused into one Pallas kernel.

    t_emb:  (B, hid_channels)
    params: output of prepare_time_embedder_params (pre-cast, pre-shaped).
    block_b: max batch tile for the gridded (large-B) path.
    out_dtype: output dtype; defaults to the parameter compute dtype.
    """
    w1c, b1c, w2c, b2c = params
    B, hid = t_emb.shape
    hid_w, temb = w1c.shape
    assert hid_w == hid

    dtype = w1c.dtype
    out_dtype = dtype if out_dtype is None else out_dtype
    x = t_emb.astype(dtype)

    itemsize = jnp.dtype(dtype).itemsize
    cost = pl.CostEstimate(
        flops=2 * B * hid * temb + 2 * B * temb * temb,
        transcendentals=0,
        bytes_accessed=(B * hid * itemsize                     # x
                        + (hid * temb + temb * temb) * itemsize  # weights
                        + 2 * temb * 4                           # biases (f32)
                        + B * temb * jnp.dtype(out_dtype).itemsize))  # out

    if B <= _SMALL_B:
        # Tiny problem: single invocation, everything VMEM-resident, no grid.
        return pl.pallas_call(
            _time_embed_kernel,
            out_shape=jax.ShapeDtypeStruct((B, temb), out_dtype),
            in_specs=[pl.BlockSpec(memory_space=pltpu.MemorySpace.VMEM)] * 5,
            out_specs=pl.BlockSpec(memory_space=pltpu.MemorySpace.VMEM),
            cost_estimate=cost,
        )(x, w1c, b1c, w2c, b2c)

    # Large batch: tile only the batch axis.  Force at least two (roughly
    # even) grid steps so dimension_semantics=("parallel",) actually shards
    # across both TensorCores on v7x; cap the tile at block_b to amortize the
    # fixed per-step pipeline overhead without blowing VMEM.
    tb = min(block_b, _round_up(-(-B // 2), 8))
    tb = max(tb, 8)
    grid = (pl.cdiv(B, tb),)

    return pl.pallas_call(
        _time_embed_kernel,
        out_shape=jax.ShapeDtypeStruct((B, temb), out_dtype),
        grid=grid,
        in_specs=[
            pl.BlockSpec((tb, hid), lambda i: (i, 0)),
            # Constant index maps: weights/biases stay VMEM-resident across
            # the whole grid (no re-DMA per step).
            pl.BlockSpec((hid, temb), lambda i: (0, 0)),
            pl.BlockSpec((1, temb), lambda i: (0, 0)),
            pl.BlockSpec((temb, temb), lambda i: (0, 0)),
            pl.BlockSpec((1, temb), lambda i: (0, 0)),
        ],
        out_specs=pl.BlockSpec((tb, temb), lambda i: (i, 0)),
        compiler_params=pltpu.CompilerParams(
            dimension_semantics=("parallel",)),
        cost_estimate=cost,
    )(x, w1c, b1c, w2c, b2c)


def _init_linear(key, fan_in, fan_out, dtype=jnp.float32):
    # Deterministic init mimicking nn.Linear default: U(-1/sqrt(fan_in), +..).
    kw, kb = jax.random.split(key)
    bound = 1.0 / (fan_in ** 0.5)
    w = jax.random.uniform(kw, (fan_in, fan_out), dtype, -bound, bound)
    b = jax.random.uniform(kb, (fan_out,), dtype, -bound, bound)
    return w, b


if __name__ == "__main__":
    B = 8
    hid_channels = 32
    time_emb_dim = 64

    key = jax.random.PRNGKey(0)
    k_x, k_l1, k_l2, k_big = jax.random.split(key, 4)

    t_emb = jax.random.normal(k_x, (B, hid_channels), jnp.float32)
    w1, b1 = _init_linear(k_l1, hid_channels, time_emb_dim)
    w2, b2 = _init_linear(k_l2, time_emb_dim, time_emb_dim)

    # Pure-JAX reference of the same forward pass.
    def ref_fn(x):
        return jnp.maximum(x @ w1 + b1, 0.0) @ w2 + b2

    # Parameter prep happens once (module init), not per forward call.
    params_f32 = prepare_time_embedder_params(w1, b1, w2, b2)
    params_bf16 = prepare_time_embedder_params(w1, b1, w2, b2,
                                               dtype=jnp.bfloat16)

    # 1) Small-batch f32 path: single invocation, unpadded (B, temb) output.
    out = jax.block_until_ready(time_linear_embedder(t_emb, params_f32))
    assert out.shape == (B, time_emb_dim)
    assert jnp.allclose(out, ref_fn(t_emb), atol=1e-4, rtol=1e-4)

    # 2) Small-batch bf16 weights/activations (f32 accumulation + f32 bias/ReLU).
    out_bf16 = jax.block_until_ready(
        time_linear_embedder(t_emb, params_bf16))
    assert out_bf16.dtype == jnp.bfloat16
    assert jnp.allclose(out_bf16.astype(jnp.float32), ref_fn(t_emb),
                        atol=5e-2, rtol=5e-2)

    # 3) Batched path: batch-only grid with >=2 "parallel" steps (megacore),
    #    weights VMEM-resident via constant index maps, unpadded output.
    B_big = 512
    t_big = jax.random.normal(k_big, (B_big, hid_channels), jnp.float32)
    out_big = jax.block_until_ready(time_linear_embedder(t_big, params_f32))
    assert out_big.shape == (B_big, time_emb_dim)
    assert jnp.allclose(out_big, ref_fn(t_big), atol=1e-4, rtol=1e-4)

    # 4) Batched bf16 path (the recommended config on v6e/v7x).
    out_big_bf16 = jax.block_until_ready(
        time_linear_embedder(t_big, params_bf16))
    assert out_big_bf16.shape == (B_big, time_emb_dim)
    assert jnp.allclose(out_big_bf16.astype(jnp.float32), ref_fn(t_big),
                        atol=5e-2, rtol=5e-2)

    print("KERNEL_OK")
</pallas_src>

<mosaic_0001>
module attributes {stable_mosaic.version = 11 : i64} {
  func.func @_time_embed_kernel(%arg0: memref<8x32xf32, #tpu.memory_space<vmem>>, %arg1: memref<32x64xf32, #tpu.memory_space<vmem>>, %arg2: memref<1x64xf32, #tpu.memory_space<vmem>>, %arg3: memref<64x64xf32, #tpu.memory_space<vmem>>, %arg4: memref<1x64xf32, #tpu.memory_space<vmem>>, %arg5: memref<8x64xf32, #tpu.memory_space<vmem>>) attributes {dimension_semantics = [], scalar_prefetch = 0 : i64, scratch_operands = 0 : i64, tpu.core_type = #tpu.core_type<tc>} {
    %c0 = arith.constant 0 : index
    %c0_0 = arith.constant 0 : index
    %0 = vector.load %arg0[%c0, %c0_0] : memref<8x32xf32, #tpu.memory_space<vmem>>, vector<8x32xf32>
    %c0_1 = arith.constant 0 : index
    %c0_2 = arith.constant 0 : index
    %1 = vector.load %arg1[%c0_1, %c0_2] : memref<32x64xf32, #tpu.memory_space<vmem>>, vector<32x64xf32>
    %cst = arith.constant dense<0.000000e+00> : vector<8x64xf32>
    %2 = tpu.matmul %0, %1, %cst {dimension_numbers = #tpu.dot_dimension_numbers<[1], [0], [0], [1], [0, 0, 1, 1], [], []>} : vector<8x32xf32>, vector<32x64xf32>, vector<8x64xf32> -> vector<8x64xf32>
    %c0_3 = arith.constant 0 : index
    %c0_4 = arith.constant 0 : index
    %3 = vector.load %arg2[%c0_3, %c0_4] : memref<1x64xf32, #tpu.memory_space<vmem>>, vector<1x64xf32>
    %4 = vector.broadcast %3 : vector<1x64xf32> to vector<8x64xf32>
    %5 = arith.addf %2, %4 : vector<8x64xf32>
    %cst_5 = arith.constant 0.000000e+00 : f32
    %6 = vector.broadcast %cst_5 : f32 to vector<8x64xf32>
    %7 = arith.maximumf %5, %6 : vector<8x64xf32>
    %c0_6 = arith.constant 0 : index
    %c0_7 = arith.constant 0 : index
    %8 = vector.load %arg3[%c0_6, %c0_7] : memref<64x64xf32, #tpu.memory_space<vmem>>, vector<64x64xf32>
    %cst_8 = arith.constant dense<0.000000e+00> : vector<8x64xf32>
    %9 = tpu.matmul %7, %8, %cst_8 {dimension_numbers = #tpu.dot_dimension_numbers<[1], [0], [0], [1], [0, 0, 1, 1], [], []>} : vector<8x64xf32>, vector<64x64xf32>, vector<8x64xf32> -> vector<8x64xf32>
    %c0_9 = arith.constant 0 : index
    %c0_10 = arith.constant 0 : index
    %10 = vector.load %arg4[%c0_9, %c0_10] : memref<1x64xf32, #tpu.memory_space<vmem>>, vector<1x64xf32>
    %11 = vector.broadcast %10 : vector<1x64xf32> to vector<8x64xf32>
    %12 = arith.addf %9, %11 : vector<8x64xf32>
    %c0_11 = arith.constant 0 : index
    %c0_12 = arith.constant 0 : index
    %13 = vector.load %arg5[%c0_11, %c0_12] : memref<8x64xf32, #tpu.memory_space<vmem>>, vector<8x64xf32>
    tpu.vector_store %arg5[%c0_11, %c0_12], %12 {strides = array<i32>} : memref<8x64xf32, #tpu.memory_space<vmem>>, vector<8x64xf32>,
    return
  }
}

</mosaic_0001>

<llo_original>
// kernel: tpu_custom_call.1
$region0: #{tpu_custom_call.1}
  #allocation0 [shape = 'u32[]', space=smem, size = 0x4, offset = 0x4, fixed_abs, tag = 'smem constant byte address 0x4 - core index']
  #allocation1 [shape = 'u32[72,128]{1,0:T(1,128)}', space=vmem, size = 0x9000, scoped, tag = 'internal scratch']
  %s0 = inlined_call_operand.hbm [shape: f32[8,32], index: 0, kind: input, shape index: {}]
  %s1 = inlined_call_operand.hbm [shape: f32[32,64], index: 1, kind: input, shape index: {}]
  %s2 = inlined_call_operand.vmem [shape: f32[1,64], index: 2, kind: input, shape index: {}]
  %s3 = inlined_call_operand.hbm [shape: f32[64,64], index: 3, kind: input, shape index: {}]
  %s4 = inlined_call_operand.vmem [shape: f32[1,64], index: 4, kind: input, shape index: {}]
  %s5 = inlined_call_operand.hbm [shape: f32[8,64], index: 5, kind: output, shape index: {}]
  %s6 = sld [smem:[#allocation0]]
  $region42: #{tpu_custom_call.1} parent=0
    _
  %s8 = ssub.s32 1, %s6
  %s9 = scalar_select 0, %s8, %s6
  $region1: #{tpu_custom_call.1} parent=0
    #allocation2 [shape = 'u8[4096]{0}', space=vmem, size = 0x1000, scoped, tag = 'input window, operand 0, single buffered']
    #allocation3 [shape = 's32[1]{0}', space=sflag, size = 0x4, scoped, tag = 'scoped memory for tpu_custom_call.1']
    #allocation4 [shape = 's32[1]{0}', space=sflag, size = 0x4, scoped, tag = 'scoped memory for tpu_custom_call.1']
    #allocation5 [shape = 'u8[16384]{0}', space=vmem, size = 0x4000, scoped, tag = 'input window, operand 1, single buffered']
    #allocation6 [shape = 's32[1]{0}', space=sflag, size = 0x4, scoped, tag = 'scoped memory for tpu_custom_call.1']
    #allocation7 [shape = 'u8[32768]{0}', space=vmem, size = 0x8000, scoped, tag = 'input window, operand 3, single buffered']
    #allocation8 [shape = 'u8[4096]{0}', space=vmem, size = 0x1000, scoped, tag = 'output window, operand 0, single buffered']
    %10 = vsyncpa [#allocation3], 0
    %11 = vsyncpa [#allocation6], 0
    %12 = vsyncpa [#allocation4], 0
    // Predicated region
    $region2: #{tpu_custom_call.1} parent=1 // pred_check
      _
    $region3: #{tpu_custom_call.1} parent=1 // pred_check_branch
      %14 = sbr.rel (0) target = $region5
    $region4: #{tpu_custom_call.1} parent=1 // pred_region
      %16 = vsyncadd [#allocation3], 0
      %s18 = sshll.u32 %s0, 4
      %s19 = int_to_ptr.hbm [resolvable:$true] %s18
      %s20 = sshll.u32 [#allocation2], 4
      %s21 = int_to_ptr.vmem [resolvable:$true] %s20
      %23 = dma.hbm_to_vmem [thread:$0]  %s19, 128, %s21, [#allocation3]
    $region5: #{tpu_custom_call.1} parent=1 // pred_fallthru
      _
    // Predicated region
    $region6: #{tpu_custom_call.1} parent=1 // pred_check
      _
    $region7: #{tpu_custom_call.1} parent=1 // pred_check_branch
      %25 = sbr.rel (0) target = $region9
    $region8: #{tpu_custom_call.1} parent=1 // pred_region
      %27 = vsyncadd [#allocation6], 0
      %s28 = sshll.u32 %s1, 4
      %s29 = int_to_ptr.hbm [resolvable:$true] %s28
      %s30 = sshll.u32 [#allocation5], 4
      %s31 = int_to_ptr.vmem [resolvable:$true] %s30
      %36 = dma.hbm_to_vmem [thread:$0]  %s29, 512, %s31, [#allocation6], 128, 128, 8
    $region9: #{tpu_custom_call.1} parent=1 // pred_fallthru
      _
    // Predicated region
    $region10: #{tpu_custom_call.1} parent=1 // pred_check
      _
    $region11: #{tpu_custom_call.1} parent=1 // pred_check_branch
      %38 = sbr.rel (0) target = $region13
    $region12: #{tpu_custom_call.1} parent=1 // pred_region
      _
    $region13: #{tpu_custom_call.1} parent=1 // pred_fallthru
      _
    // Predicated region
    $region14: #{tpu_custom_call.1} parent=1 // pred_check
      _
    $region15: #{tpu_custom_call.1} parent=1 // pred_check_branch
      %40 = sbr.rel (0) target = $region17
    $region16: #{tpu_custom_call.1} parent=1 // pred_region
      %42 = vsyncadd [#allocation6], 0
      %s43 = sshll.u32 %s3, 4
      %s44 = int_to_ptr.hbm [resolvable:$true] %s43
      %s45 = sshll.u32 [#allocation7], 4
      %s46 = int_to_ptr.vmem [resolvable:$true] %s45
      %51 = dma.hbm_to_vmem [thread:$0]  %s44, 1024, %s46, [#allocation6], 128, 128, 8
    $region17: #{tpu_custom_call.1} parent=1 // pred_fallthru
      _
    // Predicated region
    $region18: #{tpu_custom_call.1} parent=1 // pred_check
      _
    $region19: #{tpu_custom_call.1} parent=1 // pred_check_branch
      %53 = sbr.rel (0) target = $region21
    $region20: #{tpu_custom_call.1} parent=1 // pred_region
      _
    $region21: #{tpu_custom_call.1} parent=1 // pred_fallthru
      _
    // Predicated region
    $region22: #{tpu_custom_call.1} parent=1 // pred_check
      _
    $region23: #{tpu_custom_call.1} parent=1 // pred_check_branch
      %55 = sbr.rel (0) target = $region25
    $region24: #{tpu_custom_call.1} parent=1 // pred_region
      %57 = dma.done [#allocation3], 128
    $region25: #{tpu_custom_call.1} parent=1 // pred_fallthru
      _
    // Predicated region
    $region26: #{tpu_custom_call.1} parent=1 // pred_check
      _
    $region27: #{tpu_custom_call.1} parent=1 // pred_check_branch
      %59 = sbr.rel (0) target = $region29
    $region28: #{tpu_custom_call.1} parent=1 // pred_region
      %61 = dma.done [#allocation6], 512
    $region29: #{tpu_custom_call.1} parent=1 // pred_fallthru
      _
    // Predicated region
    $region30: #{tpu_custom_call.1} parent=1 // pred_check
      _
    $region31: #{tpu_custom_call.1} parent=1 // pred_check_branch
      %63 = sbr.rel (0) target = $region33
    $region32: #{tpu_custom_call.1} parent=1 // pred_region
      %65 = dma.done [#allocation6], 1024
    $region33: #{tpu_custom_call.1} parent=1 // pred_fallthru
      _
    %v66 = vld [vmem:[#allocation2] sm:$0xff]
    %v67 = vld [vmem:[#allocation5] sm:$0xff]
    %v68 = vld [vmem:[#allocation5 + $0x8] sm:$0xff]
    %v69 = vld [vmem:[#allocation5 + $0x10] sm:$0xff]
    %v70 = vld [vmem:[#allocation5 + $0x18] sm:$0xff]
    %v71 = vld [vmem:[%s2] sm:$0x1]
    %v73 = vperm.slane %v71, 0
    %vm75 = vcmask 261120
    %v77 = vsel %vm75, %v66, 0
    %79 = vmatpush.msra.mxu0 0.0
    %80 = vmatpush.msra.mxu0 0.0
    %81 = vmatpush.msra.mxu0 0.0
    %82 = vmatpush.msra.mxu0 0.0
    %83 = vmatpush.msra.mxu0 0.0
    %84 = vmatpush.msra.mxu0 0.0
    %85 = vmatpush.msra.mxu0 0.0
    %86 = vmatpush.msra.mxu0 0.0
    %87 = vmatpush.msra.mxu0 0.0
    %88 = vmatpush.msra.mxu0 0.0
    %89 = vmatpush.msra.mxu0 0.0
    %90 = vmatpush.msra.mxu0 0.0
    %91 = vmatpush.msra.mxu0 %v70
    %92 = vmatpush.msra.mxu0 %v69
    %93 = vmatpush.msra.mxu0 %v68
    %94 = vmatpush.msra.mxu0 %v67
    %95 = vmatmul.f32.gmra.mxu0 %v77
    %v96 = vpop.f32.mrf.mxu0
    %v97 = vadd.f32 %v73, %v96
    %98 = vdwg.mxu0
    %v99 = vmax.f32 %v97, 0.0
    %v100 = vld [vmem:[#allocation7] sm:$0xff]
    %v101 = vld [vmem:[#allocation7 + $0x8] sm:$0xff]
    %v102 = vld [vmem:[#allocation7 + $0x10] sm:$0xff]
    %v103 = vld [vmem:[#allocation7 + $0x18] sm:$0xff]
    %v104 = vld [vmem:[#allocation7 + $0x20] sm:$0xff]
    %v105 = vld [vmem:[#allocation7 + $0x28] sm:$0xff]
    %v106 = vld [vmem:[#allocation7 + $0x30] sm:$0xff]
    %v107 = vld [vmem:[#allocation7 + $0x38] sm:$0xff]
    %v108 = vld [vmem:[%s4] sm:$0x1]
    %v110 = vperm.slane %v108, 0
    %vm112 = vcmask 523264
    %v114 = vsel %vm112, %v99, 0
    %116 = vmatpush.msra.mxu0 0.0
    %117 = vmatpush.msra.mxu0 0.0
    %118 = vmatpush.msra.mxu0 0.0
    %119 = vmatpush.msra.mxu0 0.0
    %120 = vmatpush.msra.mxu0 0.0
    %121 = vmatpush.msra.mxu0 0.0
    %122 = vmatpush.msra.mxu0 0.0
    %123 = vmatpush.msra.mxu0 0.0
    %124 = vmatpush.msra.mxu0 %v107
    %125 = vmatpush.msra.mxu0 %v106
    %126 = vmatpush.msra.mxu0 %v105
    %127 = vmatpush.msra.mxu0 %v104
    %128 = vmatpush.msra.mxu0 %v103
    %129 = vmatpush.msra.mxu0 %v102
    %130 = vmatpush.msra.mxu0 %v101
    %131 = vmatpush.msra.mxu0 %v100
    %132 = vmatmul.f32.gmra.mxu0 %v114
    %v133 = vpop.f32.mrf.mxu0
    %v134 = vadd.f32 %v110, %v133
    %135 = vdwg.mxu0
    %136 = vst.msk [vmem:[#allocation8] sm:$0xff] %vm112, %v134
    // Predicated region
    $region34: #{tpu_custom_call.1} parent=1 // pred_check
      _
    $region35: #{tpu_custom_call.1} parent=1 // pred_check_branch
      %138 = sbr.rel (0) target = $region37
    $region36: #{tpu_custom_call.1} parent=1 // pred_region
      %140 = vsyncadd [#allocation4], 0
      %s142 = sshll.u32 [#allocation8], 4
      %s143 = int_to_ptr.vmem [resolvable:$true] %s142
      %s144 = sshll.u32 %s5, 4
      %s145 = int_to_ptr.hbm [resolvable:$true] %s144
      %147 = dma.vmem_to_hbm [thread:$0]  %s143, 128, %s145, [#allocation4]
    $region37: #{tpu_custom_call.1} parent=1 // pred_fallthru
      _
    // Predicated region
    $region38: #{tpu_custom_call.1} parent=1 // pred_check
      _
    $region39: #{tpu_custom_call.1} parent=1 // pred_check_branch
      %149 = sbr.rel (0) target = $region41
    $region40: #{tpu_custom_call.1} parent=1 // pred_region
      %151 = dma.done [#allocation4], 128
    $region41: #{tpu_custom_call.1} parent=1 // pred_fallthru
      _
    %152 = vsyncpa [#allocation3], 1
    %153 = vsyncpa [#allocation6], 1
    %154 = vsyncpa [#allocation4], 1

</llo_original>
